<compile_context>
chip_gen: v6e
topology: v6e:2x2x1
jax: 0.10.0
libtpu: 0.0.40
codegen_flags: <defaults>
</compile_context>

<pallas_src>
import math
import functools

import jax
import jax.numpy as jnp
from jax.experimental import pallas as pl
from jax.experimental.pallas import tpu as pltpu


def _attn_kernel(x_ref, w_ref, out_ref, attn_ref=None, *,
                 bblk, seq_len, d_model, head_dim, compute_dtype):
    """One grid step = (one batch block, one head)."""
    L, D, hd = seq_len, d_model, head_dim

    x = x_ref[...]                        # (bblk, L, D)   compute_dtype
    w = w_ref[0]                          # (D, 3*hd)      this head's [Wq|Wk|Wv].T

    # Fused Q/K/V projection for this head over all bblk rows: one MXU matmul.
    qkv = jnp.dot(x.reshape(bblk * L, D), w,
                  preferred_element_type=jnp.float32)           # (bblk*L, 3*hd) f32
    qkv = qkv.reshape(bblk, L, 3 * hd)

    scale = 1.0 / math.sqrt(hd)
    q = (qkv[:, :, 0 * hd:1 * hd] * scale).astype(compute_dtype)
    k = qkv[:, :, 1 * hd:2 * hd].astype(compute_dtype)
    v = qkv[:, :, 2 * hd:3 * hd].astype(compute_dtype)

    # Scores for all rows of the block: leading-batch MXU matmul, no transposes.
    s = jnp.einsum('bld,bmd->blm', q, k,
                   preferred_element_type=jnp.float32)          # (bblk, L, L) f32
    s = s - jnp.max(s, axis=-1, keepdims=True)
    e = jnp.exp(s)
    a = e * pl.reciprocal(jnp.sum(e, axis=-1, keepdims=True), approx=True)

    if attn_ref is not None:
        attn_ref[:, 0, :, :] = a.astype(attn_ref.dtype)

    o = jnp.einsum('blm,bmd->bld', a.astype(compute_dtype), v,
                   preferred_element_type=jnp.float32)          # (bblk, L, hd)
    out_ref[:, 0, :, :] = o.astype(out_ref.dtype)


def _vmem_limit_bytes():
    phys = 64 << 20                       # conservative default (v7x per-TC VMEM)
    try:
        cap = getattr(pltpu.get_tpu_info(), "vmem_capacity_bytes", None)
        if cap:
            phys = int(cap)
    except Exception:
        pass
    return (phys * 3) // 4


def spatial_self_attention(x, wq, wk, wv, *, n_head, save_attention=True,
                           compute_dtype=jnp.bfloat16, attn_dtype=jnp.float32,
                           batch_block=None):
    """Pallas implementation of Spatial_SelfAttention.forward.

    Args:
      x:  (B, L, D) float32
      wq, wk, wv: (D, D) float32 PyTorch-layout Linear weights (y = x @ W.T)
      compute_dtype: MXU input dtype (bf16 default; f32 accumulation/softmax).
      attn_dtype: dtype of the returned attention map (f32 default).
    Returns:
      (out, A) with out: (B, L, D) f32, A: (B, H, L, L) or None.
    """
    B, L, D = x.shape
    H = n_head
    assert D % H == 0
    hd = D // H

    cd = jnp.dtype(compute_dtype).itemsize
    ad = jnp.dtype(attn_dtype).itemsize

    # Head-sliced fused QKV weights: w_heads[h] = [Wq_h.T | Wk_h.T | Wv_h.T], (D, 3*hd).
    def _head_major(wm):                                     # (D, D) -> (D, H, hd)
        return wm.T.reshape(D, H, hd)
    w_heads = jnp.concatenate([_head_major(wq), _head_major(wk), _head_major(wv)],
                              axis=-1)                       # (D, H, 3*hd)
    w_heads = jnp.transpose(w_heads, (1, 0, 2)).astype(compute_dtype)  # (H, D, 3*hd)

    x_c = x.astype(compute_dtype)

    vmem_limit = _vmem_limit_bytes()

    # --- batch rows per grid step: largest that fits VMEM (double buffering,
    # qkv/score intermediates and the weight buffer all accounted for). ---
    if batch_block is None:
        usable = int(vmem_limit * 0.8)
        fixed = 2 * D * 3 * hd * cd + (1 << 20)          # weight double-buffer + slack
        per_b = (2 * L * D * cd                          # x block (double buffered)
                 + 2 * L * hd * 4                        # out block (double buffered)
                 + L * 3 * hd * 4                        # qkv intermediate (f32)
                 + 4 * L * L * 4                         # scores/exp/attn live (f32)
                 + 2 * L * hd * 4)                       # o + casts
        if save_attention:
            per_b += 2 * L * L * ad                      # attn block (double buffered)
        batch_block = 1
        for cand in range(1, B + 1):
            if B % cand == 0 and fixed + cand * per_b <= usable:
                batch_block = cand
    if L % 8 != 0:
        batch_block = 1                                  # keep in-kernel reshapes layout-trivial
    bblk = batch_block
    assert B % bblk == 0
    grid = (B // bblk, H)

    kernel = functools.partial(_attn_kernel, bblk=bblk, seq_len=L, d_model=D,
                               head_dim=hd, compute_dtype=compute_dtype)

    in_specs = [
        pl.BlockSpec((bblk, L, D), lambda b, h: (b, 0, 0)),     # resident across h
        pl.BlockSpec((1, D, 3 * hd), lambda b, h: (h, 0, 0)),   # this head's weights
    ]
    out_heads_shape = jax.ShapeDtypeStruct((B, H, L, hd), jnp.float32)
    out_heads_spec = pl.BlockSpec((bblk, 1, L, hd), lambda b, h: (b, h, 0, 0))

    if save_attention:
        out_shape = (out_heads_shape, jax.ShapeDtypeStruct((B, H, L, L), attn_dtype))
        out_specs = [out_heads_spec,
                     pl.BlockSpec((bblk, 1, L, L), lambda b, h: (b, h, 0, 0))]
    else:
        out_shape = out_heads_shape
        out_specs = out_heads_spec

    flops = 2 * B * L * D * (3 * D + 2 * L)
    transcendentals = B * H * L * L
    bytes_accessed = (B * L * D * cd                 # x
                      + (B // bblk) * 3 * D * D * cd  # head-sliced weights, refetched per batch block
                      + B * L * D * 4)                # out
    if save_attention:
        bytes_accessed += B * H * L * L * ad
    cost = pl.CostEstimate(flops=flops, transcendentals=transcendentals,
                           bytes_accessed=bytes_accessed)

    result = pl.pallas_call(
        kernel,
        out_shape=out_shape,
        grid_spec=pltpu.PrefetchScalarGridSpec(
            num_scalar_prefetch=0,
            grid=grid,
            in_specs=in_specs,
            out_specs=out_specs,
        ),
        compiler_params=pltpu.CompilerParams(
            dimension_semantics=("parallel", "parallel"),
            vmem_limit_bytes=int(vmem_limit),
        ),
        cost_estimate=cost,
    )(x_c, w_heads)

    if save_attention:
        out_heads, attn = result
    else:
        out_heads, attn = result, None

    # (B, H, L, hd) -> (B, L, D): wrapper-side layout plumbing outside the kernel.
    out = jnp.transpose(out_heads, (0, 2, 1, 3)).reshape(B, L, D)
    return out, attn


def _reference(x, wq, wk, wv, n_head):
    B, L, D = x.shape
    hd = D // n_head
    q = (x @ wq.T).reshape(B, L, n_head, hd)
    k = (x @ wk.T).reshape(B, L, n_head, hd)
    v = (x @ wv.T).reshape(B, L, n_head, hd)
    scale = 1.0 / math.sqrt(hd)
    scores = jnp.einsum('blhd,bshd->bhls', q, k)
    A = jax.nn.softmax(scale * scores, axis=-1)
    V = jnp.einsum('bhls,bshd->blhd', A, v)
    return V.reshape(B, L, D), A


if __name__ == "__main__":
    # Small shapes consistent with the module: B=4, L=8, d_model=32, n_head=4.
    B, L, D, H = 4, 8, 32, 4

    key = jax.random.PRNGKey(0)
    kx, kq, kk, kv = jax.random.split(key, 4)

    x = jax.random.normal(kx, (B, L, D), dtype=jnp.float32)
    bound = 1.0 / math.sqrt(D)
    wq = jax.random.uniform(kq, (D, D), jnp.float32, -bound, bound)
    wk = jax.random.uniform(kk, (D, D), jnp.float32, -bound, bound)
    wv = jax.random.uniform(kv, (D, D), jnp.float32, -bound, bound)

    ref_out, ref_A = _reference(x, wq, wk, wv, H)

    # f32 MXU path: tight check (only the approx reciprocal differs from exact).
    out32, A32 = spatial_self_attention(x, wq, wk, wv, n_head=H,
                                        save_attention=True,
                                        compute_dtype=jnp.float32)
    out32 = jax.block_until_ready(out32)
    A32 = jax.block_until_ready(A32)
    assert out32.shape == (B, L, D) and A32.shape == (B, H, L, L)
    assert jnp.allclose(out32, ref_out, atol=1e-2, rtol=1e-2)
    assert jnp.allclose(A32, ref_A, atol=1e-2, rtol=1e-2)

    # Default bf16 MXU path, save_attention=True.
    out, A = spatial_self_attention(x, wq, wk, wv, n_head=H, save_attention=True)
    out = jax.block_until_ready(out)
    A = jax.block_until_ready(A)
    assert jnp.allclose(out, ref_out, atol=5e-2, rtol=5e-2)
    assert jnp.allclose(A, ref_A, atol=5e-2, rtol=5e-2)

    # bf16, save_attention=False: the attention tensor never touches HBM.
    out2, A2 = spatial_self_attention(x, wq, wk, wv, n_head=H, save_attention=False)
    out2 = jax.block_until_ready(out2)
    assert A2 is None
    assert jnp.allclose(out2, ref_out, atol=5e-2, rtol=5e-2)

    print("KERNEL_OK")
</pallas_src>

<mosaic_0001>
module attributes {stable_mosaic.version = 11 : i64} {
  func.func @_attn_kernel(%arg0: i32, %arg1: i32, %arg2: memref<4x8x32xf32, #tpu.memory_space<vmem>>, %arg3: memref<1x32x24xf32, #tpu.memory_space<vmem>>, %arg4: memref<4x1x8x8xf32, #tpu.memory_space<vmem>>, %arg5: memref<4x1x8x8xf32, #tpu.memory_space<vmem>>) attributes {dimension_semantics = [#tpu.dimension_semantics<parallel>, #tpu.dimension_semantics<parallel>], iteration_bounds = array<i64: 1, 4>, scalar_prefetch = 0 : i64, scratch_operands = 0 : i64, tpu.core_type = #tpu.core_type<tc>, window_params = [{transform_indices = @transform_0, window_bounds = array<i64: 4, 8, 32>}, {transform_indices = @transform_1, window_bounds = array<i64: 1, 32, 24>}, {transform_indices = @transform_2, window_bounds = array<i64: 4, 1, 8, 8>}, {transform_indices = @transform_3, window_bounds = array<i64: 4, 1, 8, 8>}]} {
    %c0 = arith.constant 0 : index
    %c0_0 = arith.constant 0 : index
    %c0_1 = arith.constant 0 : index
    %0 = vector.load %arg2[%c0, %c0_0, %c0_1] : memref<4x8x32xf32, #tpu.memory_space<vmem>>, vector<4x8x32xf32>
    %c0_2 = arith.constant 0 : index
    %c0_3 = arith.constant 0 : index
    %c0_4 = arith.constant 0 : index
    %1 = vector.load %arg3[%c0_2, %c0_3, %c0_4] : memref<1x32x24xf32, #tpu.memory_space<vmem>>, vector<1x32x24xf32>
    %2 = vector.shape_cast %1 : vector<1x32x24xf32> to vector<32x24xf32>
    %3 = vector.shape_cast %0 : vector<4x8x32xf32> to vector<32x32xf32>
    %cst = arith.constant dense<0.000000e+00> : vector<32x24xf32>
    %4 = tpu.matmul %3, %2, %cst {dimension_numbers = #tpu.dot_dimension_numbers<[1], [0], [0], [1], [0, 0, 1, 1], [], []>} : vector<32x32xf32>, vector<32x24xf32>, vector<32x24xf32> -> vector<32x24xf32>
    %5 = vector.shape_cast %4 : vector<32x24xf32> to vector<4x8x24xf32>
    %6 = vector.extract_strided_slice %5 {offsets = [0, 0, 0], sizes = [4, 8, 8], strides = [1, 1, 1]} : vector<4x8x24xf32> to vector<4x8x8xf32>
    %cst_5 = arith.constant 0.353553385 : f32
    %7 = vector.broadcast %cst_5 : f32 to vector<4x8x8xf32>
    %8 = arith.mulf %6, %7 : vector<4x8x8xf32>
    %9 = vector.extract_strided_slice %5 {offsets = [0, 0, 8], sizes = [4, 8, 8], strides = [1, 1, 1]} : vector<4x8x24xf32> to vector<4x8x8xf32>
    %10 = vector.extract_strided_slice %5 {offsets = [0, 0, 16], sizes = [4, 8, 8], strides = [1, 1, 1]} : vector<4x8x24xf32> to vector<4x8x8xf32>
    "tpu.trace_start"() <{level = 10 : i32, message = "bld,bmd->blm"}> : () -> ()
    %cst_6 = arith.constant dense<0.000000e+00> : vector<4x8x8xf32>
    %11 = tpu.matmul %8, %9, %cst_6 {dimension_numbers = #tpu.dot_dimension_numbers<[2], [2], [1], [1], [0, 0, 0, 1, 1, 1], [0], [0]>} : vector<4x8x8xf32>, vector<4x8x8xf32>, vector<4x8x8xf32> -> vector<4x8x8xf32>
    "tpu.trace_stop"() : () -> ()
    %cst_7 = arith.constant dense<0xFF800000> : vector<4x8xf32>
    %12 = vector.multi_reduction <maximumf>, %11, %cst_7 [2] : vector<4x8x8xf32> to vector<4x8xf32>
    %13 = vector.shape_cast %12 : vector<4x8xf32> to vector<4x8x1xf32>
    %14 = vector.broadcast %13 : vector<4x8x1xf32> to vector<4x8x8xf32>
    %15 = arith.subf %11, %14 : vector<4x8x8xf32>
    %16 = math.exp %15 : vector<4x8x8xf32>
    %cst_8 = arith.constant dense<0.000000e+00> : vector<4x8xf32>
    %17 = vector.multi_reduction <add>, %16, %cst_8 [2] : vector<4x8x8xf32> to vector<4x8xf32>
    %18 = vector.shape_cast %17 : vector<4x8xf32> to vector<4x8x1xf32>
    %19 = tpu.reciprocal %18 {approx = true} : vector<4x8x1xf32> -> vector<4x8x1xf32>
    %20 = vector.broadcast %19 : vector<4x8x1xf32> to vector<4x8x8xf32>
    %21 = arith.mulf %16, %20 : vector<4x8x8xf32>
    %c0_9 = arith.constant 0 : index
    %c0_10 = arith.constant 0 : index
    %c0_11 = arith.constant 0 : index
    %c0_12 = arith.constant 0 : index
    %22 = vector.load %arg5[%c0_9, %c0_10, %c0_11, %c0_12] : memref<4x1x8x8xf32, #tpu.memory_space<vmem>>, vector<4x1x8x8xf32>
    %23 = vector.shape_cast %22 : vector<4x1x8x8xf32> to vector<4x8x8xf32>
    %24 = vector.shape_cast %21 : vector<4x8x8xf32> to vector<4x1x8x8xf32>
    tpu.vector_store %arg5[%c0_9, %c0_10, %c0_11, %c0_12], %24 {strides = array<i32>} : memref<4x1x8x8xf32, #tpu.memory_space<vmem>>, vector<4x1x8x8xf32>,
    "tpu.trace_start"() <{level = 10 : i32, message = "blm,bmd->bld"}> : () -> ()
    %cst_13 = arith.constant dense<0.000000e+00> : vector<4x8x8xf32>
    %25 = tpu.matmul %21, %10, %cst_13 {dimension_numbers = #tpu.dot_dimension_numbers<[2], [1], [1], [2], [0, 0, 0, 1, 1, 2], [0], [0]>} : vector<4x8x8xf32>, vector<4x8x8xf32>, vector<4x8x8xf32> -> vector<4x8x8xf32>
    "tpu.trace_stop"() : () -> ()
    %c0_14 = arith.constant 0 : index
    %c0_15 = arith.constant 0 : index
    %c0_16 = arith.constant 0 : index
    %c0_17 = arith.constant 0 : index
    %26 = vector.load %arg4[%c0_14, %c0_15, %c0_16, %c0_17] : memref<4x1x8x8xf32, #tpu.memory_space<vmem>>, vector<4x1x8x8xf32>
    %27 = vector.shape_cast %26 : vector<4x1x8x8xf32> to vector<4x8x8xf32>
    %28 = vector.shape_cast %25 : vector<4x8x8xf32> to vector<4x1x8x8xf32>
    tpu.vector_store %arg4[%c0_14, %c0_15, %c0_16, %c0_17], %28 {strides = array<i32>} : memref<4x1x8x8xf32, #tpu.memory_space<vmem>>, vector<4x1x8x8xf32>,
    return
  }
  func.func @transform_0(%arg0: i32, %arg1: i32) -> (i32, i32, i32) {
    %c0_i32 = arith.constant 0 : i32
    %c0_i32_0 = arith.constant 0 : i32
    %c0_i32_1 = arith.constant 0 : i32
    return %arg0, %c0_i32, %c0_i32_0 : i32, i32, i32
  }
  func.func @transform_1(%arg0: i32, %arg1: i32) -> (i32, i32, i32) {
    %c0_i32 = arith.constant 0 : i32
    %c0_i32_0 = arith.constant 0 : i32
    %c0_i32_1 = arith.constant 0 : i32
    return %arg1, %c0_i32, %c0_i32_0 : i32, i32, i32
  }
  func.func @transform_2(%arg0: i32, %arg1: i32) -> (i32, i32, i32, i32) {
    %c0_i32 = arith.constant 0 : i32
    %c0_i32_0 = arith.constant 0 : i32
    %c0_i32_1 = arith.constant 0 : i32
    return %arg0, %arg1, %c0_i32, %c0_i32_0 : i32, i32, i32, i32
  }
  func.func @transform_3(%arg0: i32, %arg1: i32) -> (i32, i32, i32, i32) {
    %c0_i32 = arith.constant 0 : i32
    %c0_i32_0 = arith.constant 0 : i32
    %c0_i32_1 = arith.constant 0 : i32
    return %arg0, %arg1, %c0_i32, %c0_i32_0 : i32, i32, i32, i32
  }
}

</mosaic_0001>

<llo_original>
// kernel: tpu_custom_call.1
$region0: #{tpu_custom_call.1}
  #allocation0 [shape = 'u32[]', space=smem, size = 0x4, offset = 0x4, fixed_abs, tag = 'smem constant byte address 0x4 - core index']
  #allocation1 [shape = 'u32[144,128]{1,0:T(1,128)}', space=vmem, size = 0x12000, scoped, tag = 'internal scratch']
  %s0 = inlined_call_operand.vmem [shape: f32[4,8,32], index: 0, kind: input, shape index: {}]
  %s1 = inlined_call_operand.vmem [shape: f32[4,32,24], index: 1, kind: input, shape index: {}]
  %s2 = inlined_call_operand.hbm [shape: f32[4,4,8,8], index: 2, kind: output, shape index: {0}]
  %s3 = inlined_call_operand.hbm [shape: f32[4,4,8,8], index: 3, kind: output, shape index: {1}]
  %4 = xla_tuple %s2, %s3
  %s5 = sld [smem:[#allocation0]]
  $region49: #{tpu_custom_call.1} parent=0
    _
  %s7 = ssub.s32 1, %s5
  %s8 = scalar_select 0, %s7, %s5
  $region1: #{tpu_custom_call.1} parent=0
    #allocation2 [shape = 'u8[32768]{0}', space=vmem, size = 0x8000, scoped, tag = 'output window, operand 0']
    #allocation3 [shape = 's32[2]{0}', space=sflag, size = 0x8, scoped, tag = 'scoped memory for tpu_custom_call.1']
    #allocation4 [shape = 'u8[32768]{0}', space=vmem, size = 0x8000, scoped, tag = 'output window, operand 1']
    #allocation5 [shape = 's32[2]{0}', space=sflag, size = 0x8, scoped, tag = 'scoped memory for tpu_custom_call.1']
    %9 = vsyncpa [#allocation3], 0
    %s10 = scalar_lea.sflag [#allocation3], 1
    %11 = vsyncpa %s10, 0
    %12 = vsyncpa [#allocation5], 0
    %s13 = scalar_lea.sflag [#allocation5], 1
    %14 = vsyncpa %s13, 0
    loop: start=0, step=1, limit=6
    $region2: #{tpu_custom_call.1} parent=1 // loop_pre_header
      _
    $region3: #{tpu_custom_call.1} parent=1 // loop_header
      %s16 = sphi 0, %s20
      %p17 = scmp.ge.s32.totalorder %s16, 6
      %s23 = sphi 0, %s35
      %s24 = sphi 0, %s31
      %s25 = sphi 0, %s23
      %s26 = sphi 0, %s24
      %s27 = sphi 0, %s25
      %s28 = sphi 0, %s26
      %s38 = sphi 0, %s40
      %s41 = sphi 0, %s38
      %s42 = sphi 0, %s41
      %s58 = sphi 0, %s42
      %s64 = sphi 0, %s66
      %s67 = sphi 0, %s64
      %s68 = sphi 0, %s67
      %s84 = sphi 0, %s68
      %s92 = sphi 0, %s94
      %s95 = sphi 0, %s92
      %s96 = sphi 0, %s95
      %s112 = sphi 0, %s96
      %s120 = sphi 0, %s122
      %s123 = sphi 0, %s120
      %s124 = sphi 0, %s123
      %s140 = sphi 0, %s124
    $region4: #{tpu_custom_call.1} parent=1 // loop_header_branch
      %19 = sbr.rel (%p17) target = $region8
    $region5: #{tpu_custom_call.1} parent=1 // loop_body
      %s21 = ssub.s32 %s16, 1
      %s22 = ssub.s32 %s16, 2
      %s29 = sadd.s32 1, %s24
      %p30 = scmp.ge.s32.totalorder %s29, 4
      %s31 = scalar_select %p30, 0, %s29
      %s32 = sadd.s32 1, %s23
      %s33 = scalar_select %p30, %s32, %s23
      %p34 = scmp.ge.s32.totalorder %s33, 1
      %s35 = scalar_select %p34, 0, %s33
      %s36 = ssub.s32 %s23, %s35
      %p37 = scmp.eq.s32.totalorder %s36, 0
      %s39 = sadd.s32 %s38, 1
      %s40 = scalar_select %p37, %s38, %s39
      %p43 = pneg %p37
      %p44 = scmp.eq.s32.totalorder %s16, 3
      %p45 = por %p43, %p44
      %p46 = scmp.ne.s32.totalorder %s38, %s41
      %p47 = scmp.eq.s32.totalorder %s16, 0
      %p48 = por %p46, %p47
      %p49 = scmp.ne.s32.totalorder %s38, %s41
      %p50 = scmp.eq.s32.totalorder %s21, 3
      %p51 = por %p49, %p50
      %p52 = scmp.ne.s32.totalorder %s41, %s42
      %p53 = scmp.eq.s32.totalorder %s21, 0
      %p54 = por %p52, %p53
      %p55 = scmp.ne.s32.totalorder %s41, %s42
      %p56 = scmp.eq.s32.totalorder %s22, 3
      %p57 = por %p55, %p56
      %p59 = scmp.ne.s32.totalorder %s42, %s58
      %p60 = scmp.eq.s32.totalorder %s22, 0
      %p61 = por %p59, %p60
      %s62 = ssub.s32 %s24, %s31
      %p63 = scmp.eq.s32.totalorder %s62, 0
      %s65 = sadd.s32 %s64, 1
      %s66 = scalar_select %p63, %s64, %s65
      %p69 = pneg %p63
      %p70 = scmp.eq.s32.totalorder %s16, 3
      %p71 = por %p69, %p70
      %p72 = scmp.ne.s32.totalorder %s64, %s67
      %p73 = scmp.eq.s32.totalorder %s16, 0
      %p74 = por %p72, %p73
      %p75 = scmp.ne.s32.totalorder %s64, %s67
      %p76 = scmp.eq.s32.totalorder %s21, 3
      %p77 = por %p75, %p76
      %p78 = scmp.ne.s32.totalorder %s67, %s68
      %p79 = scmp.eq.s32.totalorder %s21, 0
      %p80 = por %p78, %p79
      %p81 = scmp.ne.s32.totalorder %s67, %s68
      %p82 = scmp.eq.s32.totalorder %s22, 3
      %p83 = por %p81, %p82
      %p85 = scmp.ne.s32.totalorder %s68, %s84
      %p86 = scmp.eq.s32.totalorder %s22, 0
      %p87 = por %p85, %p86
      %s88 = ssub.s32 %s23, %s35
      %s89 = ssub.s32 %s24, %s31
      %s90 = sor.u32 %s88, %s89
      %p91 = scmp.eq.s32.totalorder %s90, 0
      %s93 = sadd.s32 %s92, 1
      %s94 = scalar_select %p91, %s92, %s93
      %p97 = pneg %p91
      %p98 = scmp.eq.s32.totalorder %s16, 3
      %p99 = por %p97, %p98
      %p100 = scmp.ne.s32.totalorder %s92, %s95
      %p101 = scmp.eq.s32.totalorder %s16, 0
      %p102 = por %p100, %p101
      %p103 = scmp.ne.s32.totalorder %s92, %s95
      %p104 = scmp.eq.s32.totalorder %s21, 3
      %p105 = por %p103, %p104
      %p106 = scmp.ne.s32.totalorder %s95, %s96
      %p107 = scmp.eq.s32.totalorder %s21, 0
      %p108 = por %p106, %p107
      %p109 = scmp.ne.s32.totalorder %s95, %s96
      %p110 = scmp.eq.s32.totalorder %s22, 3
      %p111 = por %p109, %p110
      %p113 = scmp.ne.s32.totalorder %s96, %s112
      %p114 = scmp.eq.s32.totalorder %s22, 0
      %p115 = por %p113, %p114
      %s116 = ssub.s32 %s23, %s35
      %s117 = ssub.s32 %s24, %s31
      %s118 = sor.u32 %s116, %s117
      %p119 = scmp.eq.s32.totalorder %s118, 0
      %s121 = sadd.s32 %s120, 1
      %s122 = scalar_select %p119, %s120, %s121
      %p125 = pneg %p119
      %p126 = scmp.eq.s32.totalorder %s16, 3
      %p127 = por %p125, %p126
      %p128 = scmp.ne.s32.totalorder %s120, %s123
      %p129 = scmp.eq.s32.totalorder %s16, 0
      %p130 = por %p128, %p129
      %p131 = scmp.ne.s32.totalorder %s120, %s123
      %p132 = scmp.eq.s32.totalorder %s21, 3
      %p133 = por %p131, %p132
      %p134 = scmp.ne.s32.totalorder %s123, %s124
      %p135 = scmp.eq.s32.totalorder %s21, 0
      %p136 = por %p134, %p135
      %p137 = scmp.ne.s32.totalorder %s123, %s124
      %p138 = scmp.eq.s32.totalorder %s22, 3
      %p139 = por %p137, %p138
      %p141 = scmp.ne.s32.totalorder %s124, %s140
      %p142 = scmp.eq.s32.totalorder %s22, 0
      %p143 = por %p141, %p142
      %p144 = scmp.le.s32.totalorder 1, %s16
      %p145 = scmp.lt.s32.totalorder %s16, 5
      %p146 = pnand %p144, %p145
      %p147 = pneg %p146
      // Predicated region
      $region9: #{tpu_custom_call.1} parent=5 // pred_check
        _
      $region10: #{tpu_custom_call.1} parent=5 // pred_check_branch
        %149 = sbr.rel (%p146) target = $region12
      $region11: #{tpu_custom_call.1} parent=5 // pred_region
        %s150 = ssub.s32 %s16, 1
        // Predicated region
        $region13: #{tpu_custom_call.1} parent=11 // pred_check
          %p151 = pneg %p54
        $region14: #{tpu_custom_call.1} parent=11 // pred_check_branch
          %153 = sbr.rel (%p151) target = $region16
        $region15: #{tpu_custom_call.1} parent=11 // pred_region
          %s154 = smul.u32 4, %s25
          %p155 = scmp.lt.s32.totalorder %s154, 3
          %s156 = scalar_select %p155, %s154, 3
          %s157 = smul.addr %s156, 8
          %s158 = scalar_lea.vmem %s0, %s157
          %s159 = smul.u32 4, %s25
        $region16: #{tpu_custom_call.1} parent=11 // pred_fallthru
          _
      $region12: #{tpu_custom_call.1} parent=5 // pred_fallthru
        _
      %p160 = scmp.lt.s32.totalorder %s16, 4
      // Predicated region
      $region17: #{tpu_custom_call.1} parent=5 // pred_check
        %p161 = pneg %p160
      $region18: #{tpu_custom_call.1} parent=5 // pred_check_branch
        %163 = sbr.rel (%p161) target = $region20
      $region19: #{tpu_custom_call.1} parent=5 // pred_region
        // Predicated region
        $region21: #{tpu_custom_call.1} parent=19 // pred_check
          %p164 = pneg %p74
        $region22: #{tpu_custom_call.1} parent=19 // pred_check_branch
          %166 = sbr.rel (%p164) target = $region24
        $region23: #{tpu_custom_call.1} parent=19 // pred_region
          %p167 = scmp.lt.s32.totalorder %s24, 3
          %s168 = scalar_select %p167, %s24, 3
          %s169 = smul.addr %s168, 4
          %s170 = smul.addr %s169, 8
          %s171 = scalar_lea.vmem %s1, %s170
        $region24: #{tpu_custom_call.1} parent=19 // pred_fallthru
          _
      $region20: #{tpu_custom_call.1} parent=5 // pred_fallthru
        _
      %p172 = scmp.le.s32.totalorder 1, %s16
      %p173 = scmp.lt.s32.totalorder %s16, 5
      %p174 = pnand %p172, %p173
      %p175 = pneg %p174
      // Predicated region
      $region25: #{tpu_custom_call.1} parent=5 // pred_check
        _
      $region26: #{tpu_custom_call.1} parent=5 // pred_check_branch
        %177 = sbr.rel (%p174) target = $region28
      $region27: #{tpu_custom_call.1} parent=5 // pred_region
        %s178 = ssub.s32 %s16, 1
        %s179 = smul.u32 4, %s25
        %p180 = scmp.lt.s32.totalorder %s179, 3
        %s181 = scalar_select %p180, %s179, 3
        %s182 = smul.addr %s181, 8
        %s183 = scalar_lea.vmem %s0, %s182
        %p184 = pneg %p54
        %p185 = pneg %p51
        %p186 = scmp.lt.s32.totalorder %s26, 3
        %s187 = scalar_select %p186, %s26, 3
        %s188 = smul.addr %s187, 4
        %s189 = smul.addr %s188, 8
        %s190 = scalar_lea.vmem %s1, %s189
        %p191 = pneg %p80
        %p192 = pneg %p77
        %p193 = pneg %p108
        %p194 = pneg %p105
        %s195 = sand.u32 %s95, 1
        %s196 = scalar_lea.sflag [#allocation3], %s195
        %s197 = sand.u32 %s95, 1
        %s198 = smul.addr %s197, 32
        %s199 = scalar_lea.vmem [#allocation2], %s198
        %p200 = pneg %p136
        %p201 = pneg %p133
        %s202 = sand.u32 %s123, 1
        %s203 = scalar_lea.sflag [#allocation5], %s202
        %s204 = sand.u32 %s123, 1
        %s205 = smul.addr %s204, 32
        %s206 = scalar_lea.vmem [#allocation4], %s205
        %s207 = smul.u32 4, %s25
        %p208 = scmp.lt.s32.totalorder %s207, 3
        %s209 = scalar_select %p208, %s207, 3
        %s210 = smul.addr %s209, 8
        %s211 = scalar_lea.vmem %s0, %s210
        %s212 = smul.u32 4, %s25
        %p213 = scmp.lt.s32.totalorder %s26, 3
        %s214 = scalar_select %p213, %s26, 3
        %s215 = smul.addr %s214, 4
        %s216 = smul.addr %s215, 8
        %s217 = scalar_lea.vmem %s1, %s216
        %s218 = smul.u32 4, %s25
        %s219 = smul.u32 4, %s25
        %v220 = vld [vmem:[%s211] sm:$0xff]
        %v221 = vld [vmem:[%s211 + $0x8] sm:$0xff]
        %v222 = vld [vmem:[%s211 + $0x10] sm:$0xff]
        %v223 = vld [vmem:[%s211 + $0x18] sm:$0xff]
        %v224 = vld [vmem:[%s217] sm:$0xff]
        %v225 = vld [vmem:[%s217 + $0x8] sm:$0xff]
        %v226 = vld [vmem:[%s217 + $0x10] sm:$0xff]
        %v227 = vld [vmem:[%s217 + $0x18] sm:$0xff]
        %vm228 = vcmask 261120
        %v230 = vsel %vm228, %v220, 0
        %v233 = vsel %vm228, %v221, 0
        %v236 = vsel %vm228, %v222, 0
        %v239 = vsel %vm228, %v223, 0
        %241 = vmatprep.subr.mxu0 0.0
        %242 = vmatpush1.msra.mxu0 0.0
        %243 = vmatprep.subr.mxu0 0.0
        %244 = vmatpush1.msra.mxu0 0.0
        %245 = vmatprep.subr.mxu0 0.0
        %246 = vmatpush1.msra.mxu0 0.0
        %247 = vmatprep.subr.mxu0 0.0
        %248 = vmatpush1.msra.mxu0 0.0
        %249 = vmatprep.subr.mxu0 0.0
        %250 = vmatpush1.msra.mxu0 0.0
        %251 = vmatprep.subr.mxu0 0.0
        %252 = vmatpush1.msra.mxu0 0.0
        %253 = vmatprep.subr.mxu0 0.0
        %254 = vmatpush1.msra.mxu0 0.0
        %255 = vmatprep.subr.mxu0 0.0
        %256 = vmatpush1.msra.mxu0 0.0
        %257 = vmatprep.subr.mxu0 0.0
        %258 = vmatpush1.msra.mxu0 0.0
        %259 = vmatprep.subr.mxu0 0.0
        %260 = vmatpush1.msra.mxu0 0.0
        %261 = vmatprep.subr.mxu0 0.0
        %262 = vmatpush1.msra.mxu0 0.0
        %263 = vmatprep.subr.mxu0 0.0
        %264 = vmatpush1.msra.mxu0 0.0
        %265 = vmatprep.subr.mxu0 0.0
        %266 = vmatpush1.msra.mxu0 %v227
        %267 = vmatprep.subr.mxu0 0.0
        %268 = vmatpush1.msra.mxu0 %v226
        %269 = vmatprep.subr.mxu0 0.0
        %270 = vmatpush1.msra.mxu0 %v225
        %271 = vmatprep.subr.mxu0 0.0
        %272 = vmatpush1.msra.mxu0 %v224
        %273 = vmatprep.subr.mxu0 0.0
        %274 = vmatpush2.msra.mxu0 0.0
        %275 = vmatprep.subr.mxu0 0.0
        %276 = vmatpush2.msra.mxu0 0.0
        %277 = vmatprep.subr.mxu0 0.0
        %278 = vmatpush2.msra.mxu0 0.0
        %279 = vmatprep.subr.mxu0 0.0
        %280 = vmatpush2.msra.mxu0 0.0
        %281 = vmatprep.subr.mxu0 0.0
        %282 = vmatpush2.msra.mxu0 0.0
        %283 = vmatprep.subr.mxu0 0.0
        %284 = vmatpush2.msra.mxu0 0.0
        %285 = vmatprep.subr.mxu0 0.0
        %286 = vmatpush2.msra.mxu0 0.0
        %287 = vmatprep.subr.mxu0 0.0
        %288 = vmatpush2.msra.mxu0 0.0
        %289 = vmatprep.subr.mxu0 0.0
        %290 = vmatpush2.msra.mxu0 0.0
        %291 = vmatprep.subr.mxu0 0.0
        %292 = vmatpush2.msra.mxu0 0.0
        %293 = vmatprep.subr.mxu0 0.0
        %294 = vmatpush2.msra.mxu0 0.0
        %295 = vmatprep.subr.mxu0 0.0
        %296 = vmatpush2.msra.mxu0 0.0
        %297 = vmatprep.subr.mxu0 0.0
        %298 = vmatpush2.msra.mxu0 0.0
        %299 = vmatprep.subr.mxu0 0.0
        %300 = vmatpush2.msra.mxu0 0.0
        %301 = vmatprep.subr.mxu0 0.0
        %302 = vmatpush2.msra.mxu0 0.0
        %303 = vmatprep.subr.mxu0 0.0
        %304 = vmatpush2.msra.mxu0 0.0
        %305 = vmatprep.mubr.f32.mxu0 0.0
        %306 = vmatmul.mubr.f32.gmra.mxu0 %v230
        %v307 = vpop.f32.mrf.mxu0
        %v308 = vadd.f32 0.0, %v307
        %v309 = vpop.f32.mrf.mxu0
        %310 = vmatprep.mubr.f32.mxu0 0.0
        %311 = vmatmul.mubr.f32.gmra.mxu0 %v233
        %v312 = vpop.f32.mrf.mxu0
        %v313 = vadd.f32 0.0, %v312
        %v314 = vpop.f32.mrf.mxu0
        %315 = vmatprep.mubr.f32.mxu0 0.0
        %316 = vmatmul.mubr.f32.gmra.mxu0 %v236
        %v317 = vpop.f32.mrf.mxu0
        %v318 = vadd.f32 0.0, %v317
        %v319 = vpop.f32.mrf.mxu0
        %320 = vmatprep.mubr.f32.mxu0 0.0
        %321 = vmatmul.mubr.f32.gmra.mxu0 %v239
        %v322 = vpop.f32.mrf.mxu0
        %v323 = vadd.f32 0.0, %v322
        %v324 = vpop.f32.mrf.mxu0
        %325 = vdwg.mxu0
        %v326 = vmul.f32 %v308, 0.35355338
        %v327 = vmul.f32 %v313, 0.35355338
        %v328 = vmul.f32 %v318, 0.35355338
        %v329 = vmul.f32 %v323, 0.35355338
        %331 = vrot.lane.b32.xlu0 %v308, 120
        %v332 = vpop.permute.xlu0 %331
        %vm333 = vcmask 64512
        %v335 = vsel %vm333, %v326, 0
        %v337 = vsel %vm333, %v332, 0
        %339 = vmatprep.subr.mxu0 0.0
        %340 = vmatpush1.xpose.msra.mxu0 0.0
        %341 = vmatprep.subr.mxu0 0.0
        %342 = vmatpush1.xpose.msra.mxu0 0.0
        %343 = vmatprep.subr.mxu0 0.0
        %344 = vmatpush1.xpose.msra.mxu0 0.0
        %345 = vmatprep.subr.mxu0 0.0
        %346 = vmatpush1.xpose.msra.mxu0 0.0
        %347 = vmatprep.subr.mxu0 0.0
        %348 = vmatpush1.xpose.msra.mxu0 0.0
        %349 = vmatprep.subr.mxu0 0.0
        %350 = vmatpush1.xpose.msra.mxu0 0.0
        %351 = vmatprep.subr.mxu0 0.0
        %352 = vmatpush1.xpose.msra.mxu0 0.0
        %353 = vmatprep.subr.mxu0 0.0
        %354 = vmatpush1.xpose.msra.mxu0 0.0
        %355 = vmatprep.subr.mxu0 0.0
        %356 = vmatpush1.xpose.msra.mxu0 0.0
        %357 = vmatprep.subr.mxu0 0.0
        %358 = vmatpush1.xpose.msra.mxu0 0.0
        %359 = vmatprep.subr.mxu0 0.0
        %360 = vmatpush1.xpose.msra.mxu0 0.0
        %361 = vmatprep.subr.mxu0 0.0
        %362 = vmatpush1.xpose.msra.mxu0 0.0
        %363 = vmatprep.subr.mxu0 0.0
        %364 = vmatpush1.xpose.msra.mxu0 0.0
        %365 = vmatprep.subr.mxu0 0.0
        %366 = vmatpush1.xpose.msra.mxu0 0.0
        %367 = vmatprep.subr.mxu0 0.0
        %368 = vmatpush1.xpose.msra.mxu0 0.0
        %369 = vmatprep.subr.mxu0 0.0
        %370 = vmatpush1.xpose.msra.mxu0 %v337
        %371 = vmatprep.subr.mxu0 0.0
        %372 = vmatpush2.xpose.msra.mxu0 0.0
        %373 = vmatprep.subr.mxu0 0.0
        %374 = vmatpush2.xpose.msra.mxu0 0.0
        %375 = vmatprep.subr.mxu0 0.0
        %376 = vmatpush2.xpose.msra.mxu0 0.0
        %377 = vmatprep.subr.mxu0 0.0
        %378 = vmatpush2.xpose.msra.mxu0 0.0
        %379 = vmatprep.subr.mxu0 0.0
        %380 = vmatpush2.xpose.msra.mxu0 0.0
        %381 = vmatprep.subr.mxu0 0.0
        %382 = vmatpush2.xpose.msra.mxu0 0.0
        %383 = vmatprep.subr.mxu0 0.0
        %384 = vmatpush2.xpose.msra.mxu0 0.0
        %385 = vmatprep.subr.mxu0 0.0
        %386 = vmatpush2.xpose.msra.mxu0 0.0
        %387 = vmatprep.subr.mxu0 0.0
        %388 = vmatpush2.xpose.msra.mxu0 0.0
        %389 = vmatprep.subr.mxu0 0.0
        %390 = vmatpush2.xpose.msra.mxu0 0.0
        %391 = vmatprep.subr.mxu0 0.0
        %392 = vmatpush2.xpose.msra.mxu0 0.0
        %393 = vmatprep.subr.mxu0 0.0
        %394 = vmatpush2.xpose.msra.mxu0 0.0
        %395 = vmatprep.subr.mxu0 0.0
        %396 = vmatpush2.xpose.msra.mxu0 0.0
        %397 = vmatprep.subr.mxu0 0.0
        %398 = vmatpush2.xpose.msra.mxu0 0.0
        %399 = vmatprep.subr.mxu0 0.0
        %400 = vmatpush2.xpose.msra.mxu0 0.0
        %401 = vmatprep.subr.mxu0 0.0
        %402 = vmatpush2.xpose.msra.mxu0 0.0
        %403 = vmatprep.mubr.f32.mxu0 0.0
        %404 = vmatmul.mubr.f32.gmra.mxu0 %v335
        %v405 = vpop.f32.mrf.mxu0
        %v406 = vadd.f32 0.0, %v405
        %v407 = vpop.f32.mrf.mxu0
        %408 = vdwg.mxu0
        %410 = vrot.lane.b32.xlu0 %v313, 120
        %v411 = vpop.permute.xlu0 %410
        %v413 = vsel %vm333, %v327, 0
        %v415 = vsel %vm333, %v411, 0
        %417 = vmatprep.subr.mxu0 0.0
        %418 = vmatpush1.xpose.msra.mxu0 0.0
        %419 = vmatprep.subr.mxu0 0.0
        %420 = vmatpush1.xpose.msra.mxu0 0.0
        %421 = vmatprep.subr.mxu0 0.0
        %422 = vmatpush1.xpose.msra.mxu0 0.0
        %423 = vmatprep.subr.mxu0 0.0
        %424 = vmatpush1.xpose.msra.mxu0 0.0
        %425 = vmatprep.subr.mxu0 0.0
        %426 = vmatpush1.xpose.msra.mxu0 0.0
        %427 = vmatprep.subr.mxu0 0.0
        %428 = vmatpush1.xpose.msra.mxu0 0.0
        %429 = vmatprep.subr.mxu0 0.0
        %430 = vmatpush1.xpose.msra.mxu0 0.0
        %431 = vmatprep.subr.mxu0 0.0
        %432 = vmatpush1.xpose.msra.mxu0 0.0
        %433 = vmatprep.subr.mxu0 0.0
        %434 = vmatpush1.xpose.msra.mxu0 0.0
        %435 = vmatprep.subr.mxu0 0.0
        %436 = vmatpush1.xpose.msra.mxu0 0.0
        %437 = vmatprep.subr.mxu0 0.0
        %438 = vmatpush1.xpose.msra.mxu0 0.0
        %439 = vmatprep.subr.mxu0 0.0
        %440 = vmatpush1.xpose.msra.mxu0 0.0
        %441 = vmatprep.subr.mxu0 0.0
        %442 = vmatpush1.xpose.msra.mxu0 0.0
        %443 = vmatprep.subr.mxu0 0.0
        %444 = vmatpush1.xpose.msra.mxu0 0.0
        %445 = vmatprep.subr.mxu0 0.0
        %446 = vmatpush1.xpose.msra.mxu0 0.0
        %447 = vmatprep.subr.mxu0 0.0
        %448 = vmatpush1.xpose.msra.mxu0 %v415
        %449 = vmatprep.subr.mxu0 0.0
        %450 = vmatpush2.xpose.msra.mxu0 0.0
        %451 = vmatprep.subr.mxu0 0.0
        %452 = vmatpush2.xpose.msra.mxu0 0.0
        %453 = vmatprep.subr.mxu0 0.0
        %454 = vmatpush2.xpose.msra.mxu0 0.0
        %455 = vmatprep.subr.mxu0 0.0
        %456 = vmatpush2.xpose.msra.mxu0 0.0
        %457 = vmatprep.subr.mxu0 0.0
        %458 = vmatpush2.xpose.msra.mxu0 0.0
        %459 = vmatprep.subr.mxu0 0.0
        %460 = vmatpush2.xpose.msra.mxu0 0.0
        %461 = vmatprep.subr.mxu0 0.0
        %462 = vmatpush2.xpose.msra.mxu0 0.0
        %463 = vmatprep.subr.mxu0 0.0
        %464 = vmatpush2.xpose.msra.mxu0 0.0
        %465 = vmatprep.subr.mxu0 0.0
        %466 = vmatpush2.xpose.msra.mxu0 0.0
        %467 = vmatprep.subr.mxu0 0.0
        %468 = vmatpush2.xpose.msra.mxu0 0.0
        %469 = vmatprep.subr.mxu0 0.0
        %470 = vmatpush2.xpose.msra.mxu0 0.0
        %471 = vmatprep.subr.mxu0 0.0
        %472 = vmatpush2.xpose.msra.mxu0 0.0
        %473 = vmatprep.subr.mxu0 0.0
        %474 = vmatpush2.xpose.msra.mxu0 0.0
        %475 = vmatprep.subr.mxu0 0.0
        %476 = vmatpush2.xpose.msra.mxu0 0.0
        %477 = vmatprep.subr.mxu0 0.0
        %478 = vmatpush2.xpose.msra.mxu0 0.0
        %479 = vmatprep.subr.mxu0 0.0
        %480 = vmatpush2.xpose.msra.mxu0 0.0
        %481 = vmatprep.mubr.f32.mxu0 0.0
        %482 = vmatmul.mubr.f32.gmra.mxu0 %v413
        %v483 = vpop.f32.mrf.mxu0
        %v484 = vadd.f32 0.0, %v483
        %v485 = vpop.f32.mrf.mxu0
        %486 = vdwg.mxu0
        %488 = vrot.lane.b32.xlu0 %v318, 120
        %v489 = vpop.permute.xlu0 %488
        %v491 = vsel %vm333, %v328, 0
        %v493 = vsel %vm333, %v489, 0
        %495 = vmatprep.subr.mxu0 0.0
        %496 = vmatpush1.xpose.msra.mxu0 0.0
        %497 = vmatprep.subr.mxu0 0.0
        %498 = vmatpush1.xpose.msra.mxu0 0.0
        %499 = vmatprep.subr.mxu0 0.0
        %500 = vmatpush1.xpose.msra.mxu0 0.0
        %501 = vmatprep.subr.mxu0 0.0
        %502 = vmatpush1.xpose.msra.mxu0 0.0
        %503 = vmatprep.subr.mxu0 0.0
        %504 = vmatpush1.xpose.msra.mxu0 0.0
        %505 = vmatprep.subr.mxu0 0.0
        %506 = vmatpush1.xpose.msra.mxu0 0.0
        %507 = vmatprep.subr.mxu0 0.0
        %508 = vmatpush1.xpose.msra.mxu0 0.0
        %509 = vmatprep.subr.mxu0 0.0
        %510 = vmatpush1.xpose.msra.mxu0 0.0
        %511 = vmatprep.subr.mxu0 0.0
        %512 = vmatpush1.xpose.msra.mxu0 0.0
        %513 = vmatprep.subr.mxu0 0.0
        %514 = vmatpush1.xpose.msra.mxu0 0.0
        %515 = vmatprep.subr.mxu0 0.0
        %516 = vmatpush1.xpose.msra.mxu0 0.0
        %517 = vmatprep.subr.mxu0 0.0
        %518 = vmatpush1.xpose.msra.mxu0 0.0
        %519 = vmatprep.subr.mxu0 0.0
        %520 = vmatpush1.xpose.msra.mxu0 0.0
        %521 = vmatprep.subr.mxu0 0.0
        %522 = vmatpush1.xpose.msra.mxu0 0.0
        %523 = vmatprep.subr.mxu0 0.0
        %524 = vmatpush1.xpose.msra.mxu0 0.0
        %525 = vmatprep.subr.mxu0 0.0
        %526 = vmatpush1.xpose.msra.mxu0 %v493
        %527 = vmatprep.subr.mxu0 0.0
        %528 = vmatpush2.xpose.msra.mxu0 0.0
        %529 = vmatprep.subr.mxu0 0.0
        %530 = vmatpush2.xpose.msra.mxu0 0.0
        %531 = vmatprep.subr.mxu0 0.0
        %532 = vmatpush2.xpose.msra.mxu0 0.0
        %533 = vmatprep.subr.mxu0 0.0
        %534 = vmatpush2.xpose.msra.mxu0 0.0
        %535 = vmatprep.subr.mxu0 0.0
        %536 = vmatpush2.xpose.msra.mxu0 0.0
        %537 = vmatprep.subr.mxu0 0.0
        %538 = vmatpush2.xpose.msra.mxu0 0.0
        %539 = vmatprep.subr.mxu0 0.0
        %540 = vmatpush2.xpose.msra.mxu0 0.0
        %541 = vmatprep.subr.mxu0 0.0
        %542 = vmatpush2.xpose.msra.mxu0 0.0
        %543 = vmatprep.subr.mxu0 0.0
        %544 = vmatpush2.xpose.msra.mxu0 0.0
        %545 = vmatprep.subr.mxu0 0.0
        %546 = vmatpush2.xpose.msra.mxu0 0.0
        %547 = vmatprep.subr.mxu0 0.0
        %548 = vmatpush2.xpose.msra.mxu0 0.0
        %549 = vmatprep.subr.mxu0 0.0
        %550 = vmatpush2.xpose.msra.mxu0 0.0
        %551 = vmatprep.subr.mxu0 0.0
        %552 = vmatpush2.xpose.msra.mxu0 0.0
        %553 = vmatprep.subr.mxu0 0.0
        %554 = vmatpush2.xpose.msra.mxu0 0.0
        %555 = vmatprep.subr.mxu0 0.0
        %556 = vmatpush2.xpose.msra.mxu0 0.0
        %557 = vmatprep.subr.mxu0 0.0
        %558 = vmatpush2.xpose.msra.mxu0 0.0
        %559 = vmatprep.mubr.f32.mxu0 0.0
        %560 = vmatmul.mubr.f32.gmra.mxu0 %v491
        %v561 = vpop.f32.mrf.mxu0
        %v562 = vadd.f32 0.0, %v561
        %v563 = vpop.f32.mrf.mxu0
        %564 = vdwg.mxu0
        %566 = vrot.lane.b32.xlu0 %v323, 120
        %v567 = vpop.permute.xlu0 %566
        %v569 = vsel %vm333, %v329, 0
        %v571 = vsel %vm333, %v567, 0
        %573 = vmatprep.subr.mxu0 0.0
        %574 = vmatpush1.xpose.msra.mxu0 0.0
        %575 = vmatprep.subr.mxu0 0.0
        %576 = vmatpush1.xpose.msra.mxu0 0.0
        %577 = vmatprep.subr.mxu0 0.0
        %578 = vmatpush1.xpose.msra.mxu0 0.0
        %579 = vmatprep.subr.mxu0 0.0
        %580 = vmatpush1.xpose.msra.mxu0 0.0
        %581 = vmatprep.subr.mxu0 0.0
        %582 = vmatpush1.xpose.msra.mxu0 0.0
        %583 = vmatprep.subr.mxu0 0.0
        %584 = vmatpush1.xpose.msra.mxu0 0.0
        %585 = vmatprep.subr.mxu0 0.0
        %586 = vmatpush1.xpose.msra.mxu0 0.0
        %587 = vmatprep.subr.mxu0 0.0
        %588 = vmatpush1.xpose.msra.mxu0 0.0
        %589 = vmatprep.subr.mxu0 0.0
        %590 = vmatpush1.xpose.msra.mxu0 0.0
        %591 = vmatprep.subr.mxu0 0.0
        %592 = vmatpush1.xpose.msra.mxu0 0.0
        %593 = vmatprep.subr.mxu0 0.0
        %594 = vmatpush1.xpose.msra.mxu0 0.0
        %595 = vmatprep.subr.mxu0 0.0
        %596 = vmatpush1.xpose.msra.mxu0 0.0
        %597 = vmatprep.subr.mxu0 0.0
        %598 = vmatpush1.xpose.msra.mxu0 0.0
        %599 = vmatprep.subr.mxu0 0.0
        %600 = vmatpush1.xpose.msra.mxu0 0.0
        %601 = vmatprep.subr.mxu0 0.0
        %602 = vmatpush1.xpose.msra.mxu0 0.0
        %603 = vmatprep.subr.mxu0 0.0
        %604 = vmatpush1.xpose.msra.mxu0 %v571
        %605 = vmatprep.subr.mxu0 0.0
        %606 = vmatpush2.xpose.msra.mxu0 0.0
        %607 = vmatprep.subr.mxu0 0.0
        %608 = vmatpush2.xpose.msra.mxu0 0.0
        %609 = vmatprep.subr.mxu0 0.0
        %610 = vmatpush2.xpose.msra.mxu0 0.0
        %611 = vmatprep.subr.mxu0 0.0
        %612 = vmatpush2.xpose.msra.mxu0 0.0
        %613 = vmatprep.subr.mxu0 0.0
        %614 = vmatpush2.xpose.msra.mxu0 0.0
        %615 = vmatprep.subr.mxu0 0.0
        %616 = vmatpush2.xpose.msra.mxu0 0.0
        %617 = vmatprep.subr.mxu0 0.0
        %618 = vmatpush2.xpose.msra.mxu0 0.0
        %619 = vmatprep.subr.mxu0 0.0
        %620 = vmatpush2.xpose.msra.mxu0 0.0
        %621 = vmatprep.subr.mxu0 0.0
        %622 = vmatpush2.xpose.msra.mxu0 0.0
        %623 = vmatprep.subr.mxu0 0.0
        %624 = vmatpush2.xpose.msra.mxu0 0.0
        %625 = vmatprep.subr.mxu0 0.0
        %626 = vmatpush2.xpose.msra.mxu0 0.0
        %627 = vmatprep.subr.mxu0 0.0
        %628 = vmatpush2.xpose.msra.mxu0 0.0
        %629 = vmatprep.subr.mxu0 0.0
        %630 = vmatpush2.xpose.msra.mxu0 0.0
        %631 = vmatprep.subr.mxu0 0.0
        %632 = vmatpush2.xpose.msra.mxu0 0.0
        %633 = vmatprep.subr.mxu0 0.0
        %634 = vmatpush2.xpose.msra.mxu0 0.0
        %635 = vmatprep.subr.mxu0 0.0
        %636 = vmatpush2.xpose.msra.mxu0 0.0
        %637 = vmatprep.mubr.f32.mxu0 0.0
        %638 = vmatmul.mubr.f32.gmra.mxu0 %v569
        %v639 = vpop.f32.mrf.mxu0
        %v640 = vadd.f32 0.0, %v639
        %v641 = vpop.f32.mrf.mxu0
        %642 = vdwg.mxu0
        %v643 = vsel %vm333, %v406, -inf
        %644 = vmax.xlane.f32.xlu0 %v643
        %v645 = vpop.xlane.xlu0 %644
        %v646 = vsel %vm333, %v484, -inf
        %647 = vmax.xlane.f32.xlu0 %v646
        %v648 = vpop.xlane.xlu0 %647
        %v649 = vsel %vm333, %v562, -inf
        %650 = vmax.xlane.f32.xlu0 %v649
        %v651 = vpop.xlane.xlu0 %650
        %v652 = vsel %vm333, %v640, -inf
        %653 = vmax.xlane.f32.xlu0 %v652
        %v654 = vpop.xlane.xlu0 %653
        %v655 = vsub.f32 %v406, %v645
        %v656 = vsub.f32 %v484, %v648
        %v657 = vsub.f32 %v562, %v651
        %v658 = vsub.f32 %v640, %v654
        %v659 = vmul.f32 %v655, 1.442695
        %v660 = vpow.pop %v659
        %v661 = vmul.f32 %v656, 1.442695
        %v662 = vpow.pop %v661
        %v663 = vmul.f32 %v657, 1.442695
        %v664 = vpow.pop %v663
        %v665 = vmul.f32 %v658, 1.442695
        %v666 = vpow.pop %v665
        %v667 = vsel %vm333, %v660, 0.0
        %668 = vadd.xlane.f32.xlu0 %v667
        %v669 = vpop.xlane.xlu0 %668
        %v670 = vsel %vm333, %v662, 0.0
        %671 = vadd.xlane.f32.xlu0 %v670
        %v672 = vpop.xlane.xlu0 %671
        %v673 = vsel %vm333, %v664, 0.0
        %674 = vadd.xlane.f32.xlu0 %v673
        %v675 = vpop.xlane.xlu0 %674
        %v676 = vsel %vm333, %v666, 0.0
        %677 = vadd.xlane.f32.xlu0 %v676
        %v678 = vpop.xlane.xlu0 %677
        %v679 = vrcp.pop %v669
        %v680 = vrcp.pop %v672
        %v681 = vrcp.pop %v675
        %v682 = vrcp.pop %v678
        %v683 = vmul.f32 %v660, %v679
        %v684 = vmul.f32 %v662, %v680
        %v685 = vmul.f32 %v664, %v681
        %v686 = vmul.f32 %v666, %v682
        %687 = vst.msk [vmem:[%s206] sm:$0xff] %vm333, %v683
        %688 = vst.msk [vmem:[%s206 + $0x8] sm:$0xff] %vm333, %v684
        %689 = vst.msk [vmem:[%s206 + $0x10] sm:$0xff] %vm333, %v685
        %690 = vst.msk [vmem:[%s206 + $0x18] sm:$0xff] %vm333, %v686
        %691 = vrot.lane.b32.xlu0 %v308, 112
        %v692 = vpop.permute.xlu0 %691
        %v695 = vsel %vm333, %v683, 0
        %697 = vmatprep.subr.mxu0 0.0
        %698 = vmatpush1.msra.mxu0 0.0
        %699 = vmatprep.subr.mxu0 0.0
        %700 = vmatpush1.msra.mxu0 0.0
        %701 = vmatprep.subr.mxu0 0.0
        %702 = vmatpush1.msra.mxu0 0.0
        %703 = vmatprep.subr.mxu0 0.0
        %704 = vmatpush1.msra.mxu0 0.0
        %705 = vmatprep.subr.mxu0 0.0
        %706 = vmatpush1.msra.mxu0 0.0
        %707 = vmatprep.subr.mxu0 0.0
        %708 = vmatpush1.msra.mxu0 0.0
        %709 = vmatprep.subr.mxu0 0.0
        %710 = vmatpush1.msra.mxu0 0.0
        %711 = vmatprep.subr.mxu0 0.0
        %712 = vmatpush1.msra.mxu0 0.0
        %713 = vmatprep.subr.mxu0 0.0
        %714 = vmatpush1.msra.mxu0 0.0
        %715 = vmatprep.subr.mxu0 0.0
        %716 = vmatpush1.msra.mxu0 0.0
        %717 = vmatprep.subr.mxu0 0.0
        %718 = vmatpush1.msra.mxu0 0.0
        %719 = vmatprep.subr.mxu0 0.0
        %720 = vmatpush1.msra.mxu0 0.0
        %721 = vmatprep.subr.mxu0 0.0
        %722 = vmatpush1.msra.mxu0 0.0
        %723 = vmatprep.subr.mxu0 0.0
        %724 = vmatpush1.msra.mxu0 0.0
        %725 = vmatprep.subr.mxu0 0.0
        %726 = vmatpush1.msra.mxu0 0.0
        %727 = vmatprep.subr.mxu0 0.0
        %728 = vmatpush1.msra.mxu0 %v692
        %729 = vmatprep.subr.mxu0 0.0
        %730 = vmatpush2.msra.mxu0 0.0
        %731 = vmatprep.subr.mxu0 0.0
        %732 = vmatpush2.msra.mxu0 0.0
        %733 = vmatprep.subr.mxu0 0.0
        %734 = vmatpush2.msra.mxu0 0.0
        %735 = vmatprep.subr.mxu0 0.0
        %736 = vmatpush2.msra.mxu0 0.0
        %737 = vmatprep.subr.mxu0 0.0
        %738 = vmatpush2.msra.mxu0 0.0
        %739 = vmatprep.subr.mxu0 0.0
        %740 = vmatpush2.msra.mxu0 0.0
        %741 = vmatprep.subr.mxu0 0.0
        %742 = vmatpush2.msra.mxu0 0.0
        %743 = vmatprep.subr.mxu0 0.0
        %744 = vmatpush2.msra.mxu0 0.0
        %745 = vmatprep.subr.mxu0 0.0
        %746 = vmatpush2.msra.mxu0 0.0
        %747 = vmatprep.subr.mxu0 0.0
        %748 = vmatpush2.msra.mxu0 0.0
        %749 = vmatprep.subr.mxu0 0.0
        %750 = vmatpush2.msra.mxu0 0.0
        %751 = vmatprep.subr.mxu0 0.0
        %752 = vmatpush2.msra.mxu0 0.0
        %753 = vmatprep.subr.mxu0 0.0
        %754 = vmatpush2.msra.mxu0 0.0
        %755 = vmatprep.subr.mxu0 0.0
        %756 = vmatpush2.msra.mxu0 0.0
        %757 = vmatprep.subr.mxu0 0.0
        %758 = vmatpush2.msra.mxu0 0.0
        %759 = vmatprep.subr.mxu0 0.0
        %760 = vmatpush2.msra.mxu0 0.0
        %761 = vmatprep.mubr.f32.mxu0 0.0
        %762 = vmatmul.mubr.f32.gmra.mxu0 %v695
        %v763 = vpop.f32.mrf.mxu0
        %v764 = vadd.f32 0.0, %v763
        %v765 = vpop.f32.mrf.mxu0
        %766 = vdwg.mxu0
        %767 = vrot.lane.b32.xlu0 %v313, 112
        %v768 = vpop.permute.xlu0 %767
        %v771 = vsel %vm333, %v684, 0
        %773 = vmatprep.subr.mxu0 0.0
        %774 = vmatpush1.msra.mxu0 0.0
        %775 = vmatprep.subr.mxu0 0.0
        %776 = vmatpush1.msra.mxu0 0.0
        %777 = vmatprep.subr.mxu0 0.0
        %778 = vmatpush1.msra.mxu0 0.0
        %779 = vmatprep.subr.mxu0 0.0
        %780 = vmatpush1.msra.mxu0 0.0
        %781 = vmatprep.subr.mxu0 0.0
        %782 = vmatpush1.msra.mxu0 0.0
        %783 = vmatprep.subr.mxu0 0.0
        %784 = vmatpush1.msra.mxu0 0.0
        %785 = vmatprep.subr.mxu0 0.0
        %786 = vmatpush1.msra.mxu0 0.0
        %787 = vmatprep.subr.mxu0 0.0
        %788 = vmatpush1.msra.mxu0 0.0
        %789 = vmatprep.subr.mxu0 0.0
        %790 = vmatpush1.msra.mxu0 0.0
        %791 = vmatprep.subr.mxu0 0.0
        %792 = vmatpush1.msra.mxu0 0.0
        %793 = vmatprep.subr.mxu0 0.0
        %794 = vmatpush1.msra.mxu0 0.0
        %795 = vmatprep.subr.mxu0 0.0
        %796 = vmatpush1.msra.mxu0 0.0
        %797 = vmatprep.subr.mxu0 0.0
        %798 = vmatpush1.msra.mxu0 0.0
        %799 = vmatprep.subr.mxu0 0.0
        %800 = vmatpush1.msra.mxu0 0.0
        %801 = vmatprep.subr.mxu0 0.0
        %802 = vmatpush1.msra.mxu0 0.0
        %803 = vmatprep.subr.mxu0 0.0
        %804 = vmatpush1.msra.mxu0 %v768
        %805 = vmatprep.subr.mxu0 0.0
        %806 = vmatpush2.msra.mxu0 0.0
        %807 = vmatprep.subr.mxu0 0.0
        %808 = vmatpush2.msra.mxu0 0.0
        %809 = vmatprep.subr.mxu0 0.0
        %810 = vmatpush2.msra.mxu0 0.0
        %811 = vmatprep.subr.mxu0 0.0
        %812 = vmatpush2.msra.mxu0 0.0
        %813 = vmatprep.subr.mxu0 0.0
        %814 = vmatpush2.msra.mxu0 0.0
        %815 = vmatprep.subr.mxu0 0.0
        %816 = vmatpush2.msra.mxu0 0.0
        %817 = vmatprep.subr.mxu0 0.0
        %818 = vmatpush2.msra.mxu0 0.0
        %819 = vmatprep.subr.mxu0 0.0
        %820 = vmatpush2.msra.mxu0 0.0
        %821 = vmatprep.subr.mxu0 0.0
        %822 = vmatpush2.msra.mxu0 0.0
        %823 = vmatprep.subr.mxu0 0.0
        %824 = vmatpush2.msra.mxu0 0.0
        %825 = vmatprep.subr.mxu0 0.0
        %826 = vmatpush2.msra.mxu0 0.0
        %827 = vmatprep.subr.mxu0 0.0
        %828 = vmatpush2.msra.mxu0 0.0
        %829 = vmatprep.subr.mxu0 0.0
        %830 = vmatpush2.msra.mxu0 0.0
        %831 = vmatprep.subr.mxu0 0.0
        %832 = vmatpush2.msra.mxu0 0.0
        %833 = vmatprep.subr.mxu0 0.0
        %834 = vmatpush2.msra.mxu0 0.0
        %835 = vmatprep.subr.mxu0 0.0
        %836 = vmatpush2.msra.mxu0 0.0
        %837 = vmatprep.mubr.f32.mxu0 0.0
        %838 = vmatmul.mubr.f32.gmra.mxu0 %v771
        %v839 = vpop.f32.mrf.mxu0
        %v840 = vadd.f32 0.0, %v839
        %v841 = vpop.f32.mrf.mxu0
        %842 = vdwg.mxu0
        %843 = vrot.lane.b32.xlu0 %v318, 112
        %v844 = vpop.permute.xlu0 %843
        %v847 = vsel %vm333, %v685, 0
        %849 = vmatprep.subr.mxu0 0.0
        %850 = vmatpush1.msra.mxu0 0.0
        %851 = vmatprep.subr.mxu0 0.0
        %852 = vmatpush1.msra.mxu0 0.0
        %853 = vmatprep.subr.mxu0 0.0
        %854 = vmatpush1.msra.mxu0 0.0
        %855 = vmatprep.subr.mxu0 0.0
        %856 = vmatpush1.msra.mxu0 0.0
        %857 = vmatprep.subr.mxu0 0.0
        %858 = vmatpush1.msra.mxu0 0.0
        %859 = vmatprep.subr.mxu0 0.0
        %860 = vmatpush1.msra.mxu0 0.0
        %861 = vmatprep.subr.mxu0 0.0
        %862 = vmatpush1.msra.mxu0 0.0
        %863 = vmatprep.subr.mxu0 0.0
        %864 = vmatpush1.msra.mxu0 0.0
        %865 = vmatprep.subr.mxu0 0.0
        %866 = vmatpush1.msra.mxu0 0.0
        %867 = vmatprep.subr.mxu0 0.0
        %868 = vmatpush1.msra.mxu0 0.0
        %869 = vmatprep.subr.mxu0 0.0
        %870 = vmatpush1.msra.mxu0 0.0
        %871 = vmatprep.subr.mxu0 0.0
        %872 = vmatpush1.msra.mxu0 0.0
        %873 = vmatprep.subr.mxu0 0.0
        %874 = vmatpush1.msra.mxu0 0.0
        %875 = vmatprep.subr.mxu0 0.0
        %876 = vmatpush1.msra.mxu0 0.0
        %877 = vmatprep.subr.mxu0 0.0
        %878 = vmatpush1.msra.mxu0 0.0
        %879 = vmatprep.subr.mxu0 0.0
        %880 = vmatpush1.msra.mxu0 %v844
        %881 = vmatprep.subr.mxu0 0.0
        %882 = vmatpush2.msra.mxu0 0.0
        %883 = vmatprep.subr.mxu0 0.0
        %884 = vmatpush2.msra.mxu0 0.0
        %885 = vmatprep.subr.mxu0 0.0
        %886 = vmatpush2.msra.mxu0 0.0
        %887 = vmatprep.subr.mxu0 0.0
        %888 = vmatpush2.msra.mxu0 0.0
        %889 = vmatprep.subr.mxu0 0.0
        %890 = vmatpush2.msra.mxu0 0.0
        %891 = vmatprep.subr.mxu0 0.0
        %892 = vmatpush2.msra.mxu0 0.0
        %893 = vmatprep.subr.mxu0 0.0
        %894 = vmatpush2.msra.mxu0 0.0
        %895 = vmatprep.subr.mxu0 0.0
        %896 = vmatpush2.msra.mxu0 0.0
        %897 = vmatprep.subr.mxu0 0.0
        %898 = vmatpush2.msra.mxu0 0.0
        %899 = vmatprep.subr.mxu0 0.0
        %900 = vmatpush2.msra.mxu0 0.0
        %901 = vmatprep.subr.mxu0 0.0
        %902 = vmatpush2.msra.mxu0 0.0
        %903 = vmatprep.subr.mxu0 0.0
        %904 = vmatpush2.msra.mxu0 0.0
        %905 = vmatprep.subr.mxu0 0.0
        %906 = vmatpush2.msra.mxu0 0.0
        %907 = vmatprep.subr.mxu0 0.0
        %908 = vmatpush2.msra.mxu0 0.0
        %909 = vmatprep.subr.mxu0 0.0
        %910 = vmatpush2.msra.mxu0 0.0
        %911 = vmatprep.subr.mxu0 0.0
        %912 = vmatpush2.msra.mxu0 0.0
        %913 = vmatprep.mubr.f32.mxu0 0.0
        %914 = vmatmul.mubr.f32.gmra.mxu0 %v847
        %v915 = vpop.f32.mrf.mxu0
        %v916 = vadd.f32 0.0, %v915
        %v917 = vpop.f32.mrf.mxu0
        %918 = vdwg.mxu0
        %919 = vrot.lane.b32.xlu0 %v323, 112
        %v920 = vpop.permute.xlu0 %919
        %v923 = vsel %vm333, %v686, 0
        %925 = vmatprep.subr.mxu0 0.0
        %926 = vmatpush1.msra.mxu0 0.0
        %927 = vmatprep.subr.mxu0 0.0
        %928 = vmatpush1.msra.mxu0 0.0
        %929 = vmatprep.subr.mxu0 0.0
        %930 = vmatpush1.msra.mxu0 0.0
        %931 = vmatprep.subr.mxu0 0.0
        %932 = vmatpush1.msra.mxu0 0.0
        %933 = vmatprep.subr.mxu0 0.0
        %934 = vmatpush1.msra.mxu0 0.0
        %935 = vmatprep.subr.mxu0 0.0
        %936 = vmatpush1.msra.mxu0 0.0
        %937 = vmatprep.subr.mxu0 0.0
        %938 = vmatpush1.msra.mxu0 0.0
        %939 = vmatprep.subr.mxu0 0.0
        %940 = vmatpush1.msra.mxu0 0.0
        %941 = vmatprep.subr.mxu0 0.0
        %942 = vmatpush1.msra.mxu0 0.0
        %943 = vmatprep.subr.mxu0 0.0
        %944 = vmatpush1.msra.mxu0 0.0
        %945 = vmatprep.subr.mxu0 0.0
        %946 = vmatpush1.msra.mxu0 0.0
        %947 = vmatprep.subr.mxu0 0.0
        %948 = vmatpush1.msra.mxu0 0.0
        %949 = vmatprep.subr.mxu0 0.0
        %950 = vmatpush1.msra.mxu0 0.0
        %951 = vmatprep.subr.mxu0 0.0
        %952 = vmatpush1.msra.mxu0 0.0
        %953 = vmatprep.subr.mxu0 0.0
        %954 = vmatpush1.msra.mxu0 0.0
        %955 = vmatprep.subr.mxu0 0.0
        %956 = vmatpush1.msra.mxu0 %v920
        %957 = vmatprep.subr.mxu0 0.0
        %958 = vmatpush2.msra.mxu0 0.0
        %959 = vmatprep.subr.mxu0 0.0
        %960 = vmatpush2.msra.mxu0 0.0
        %961 = vmatprep.subr.mxu0 0.0
        %962 = vmatpush2.msra.mxu0 0.0
        %963 = vmatprep.subr.mxu0 0.0
        %964 = vmatpush2.msra.mxu0 0.0
        %965 = vmatprep.subr.mxu0 0.0
        %966 = vmatpush2.msra.mxu0 0.0
        %967 = vmatprep.subr.mxu0 0.0
        %968 = vmatpush2.msra.mxu0 0.0
        %969 = vmatprep.subr.mxu0 0.0
        %970 = vmatpush2.msra.mxu0 0.0
        %971 = vmatprep.subr.mxu0 0.0
        %972 = vmatpush2.msra.mxu0 0.0
        %973 = vmatprep.subr.mxu0 0.0
        %974 = vmatpush2.msra.mxu0 0.0
        %975 = vmatprep.subr.mxu0 0.0
        %976 = vmatpush2.msra.mxu0 0.0
        %977 = vmatprep.subr.mxu0 0.0
        %978 = vmatpush2.msra.mxu0 0.0
        %979 = vmatprep.subr.mxu0 0.0
        %980 = vmatpush2.msra.mxu0 0.0
        %981 = vmatprep.subr.mxu0 0.0
        %982 = vmatpush2.msra.mxu0 0.0
        %983 = vmatprep.subr.mxu0 0.0
        %984 = vmatpush2.msra.mxu0 0.0
        %985 = vmatprep.subr.mxu0 0.0
        %986 = vmatpush2.msra.mxu0 0.0
        %987 = vmatprep.subr.mxu0 0.0
        %988 = vmatpush2.msra.mxu0 0.0
        %989 = vmatprep.mubr.f32.mxu0 0.0
        %990 = vmatmul.mubr.f32.gmra.mxu0 %v923
        %v991 = vpop.f32.mrf.mxu0
        %v992 = vadd.f32 0.0, %v991
        %v993 = vpop.f32.mrf.mxu0
        %994 = vdwg.mxu0
        %995 = vst.msk [vmem:[%s199] sm:$0xff] %vm333, %v764
        %996 = vst.msk [vmem:[%s199 + $0x8] sm:$0xff] %vm333, %v840
        %997 = vst.msk [vmem:[%s199 + $0x10] sm:$0xff] %vm333, %v916
        %998 = vst.msk [vmem:[%s199 + $0x18] sm:$0xff] %vm333, %v992
        %s999 = sand.u32 %s95, 1
        %s1000 = scalar_lea.sflag [#allocation3], %s999
        %s1001 = sand.u32 %s95, 1
        %s1002 = smul.addr %s1001, 32
        %s1003 = scalar_lea.vmem [#allocation2], %s1002
        %s1004 = sand.u32 %s123, 1
        %s1005 = scalar_lea.sflag [#allocation5], %s1004
        %s1006 = sand.u32 %s123, 1
        %s1007 = smul.addr %s1006, 32
        %s1008 = scalar_lea.vmem [#allocation4], %s1007
        // Predicated region
        $region29: #{tpu_custom_call.1} parent=27 // pred_check
          %p1009 = pneg %p105
        $region30: #{tpu_custom_call.1} parent=27 // pred_check_branch
          %1011 = sbr.rel (%p1009) target = $region32
        $region31: #{tpu_custom_call.1} parent=27 // pred_region
          %s1012 = smul.u32 4, %s25
          %s1014 = ssub.s32 512, 512
          %1015 = vsyncadd %s1000, %s1014
          %s1016 = smul.addr %s1012, 4
          %s1017 = sadd.s32 %s26, %s1016
          %s1018 = smul.addr %s1017, 128
          %s1019 = scalar_lea.hbm %s2, %s1018
          %s1020 = sshll.u32 %s1003, 4
          %s1021 = int_to_ptr.vmem [resolvable:$true] %s1020
          %1026 = dma.vmem_to_hbm [thread:$0]  %s1021, 512, %s1019, %s1000, 128, 512, 8
        $region32: #{tpu_custom_call.1} parent=27 // pred_fallthru
          _
        // Predicated region
        $region33: #{tpu_custom_call.1} parent=27 // pred_check
          %p1027 = pneg %p133
        $region34: #{tpu_custom_call.1} parent=27 // pred_check_branch
          %1029 = sbr.rel (%p1027) target = $region36
        $region35: #{tpu_custom_call.1} parent=27 // pred_region
          %s1030 = smul.u32 4, %s25
          %s1032 = ssub.s32 512, 512
          %1033 = vsyncadd %s1005, %s1032
          %s1034 = smul.addr %s1030, 4
          %s1035 = sadd.s32 %s26, %s1034
          %s1036 = smul.addr %s1035, 128
          %s1037 = scalar_lea.hbm %s3, %s1036
          %s1038 = sshll.u32 %s1008, 4
          %s1039 = int_to_ptr.vmem [resolvable:$true] %s1038
          %1044 = dma.vmem_to_hbm [thread:$0]  %s1039, 512, %s1037, %s1005, 128, 512, 8
        $region36: #{tpu_custom_call.1} parent=27 // pred_fallthru
          _
      $region28: #{tpu_custom_call.1} parent=5 // pred_fallthru
        _
      %p1045 = scmp.le.s32.totalorder 2, %s16
      // Predicated region
      $region37: #{tpu_custom_call.1} parent=5 // pred_check
        %p1046 = pneg %p1045
      $region38: #{tpu_custom_call.1} parent=5 // pred_check_branch
        %1048 = sbr.rel (%p1046) target = $region40
      $region39: #{tpu_custom_call.1} parent=5 // pred_region
        %s1049 = ssub.s32 %s16, 2
        // Predicated region
        $region41: #{tpu_custom_call.1} parent=39 // pred_check
          %p1050 = pneg %p111
        $region42: #{tpu_custom_call.1} parent=39 // pred_check_branch
          %1052 = sbr.rel (%p1050) target = $region44
        $region43: #{tpu_custom_call.1} parent=39 // pred_region
          %s1053 = sand.u32 %s96, 1
          %s1054 = scalar_lea.sflag [#allocation3], %s1053
          %s1055 = sand.u32 %s96, 1
          %s1056 = smul.addr %s1055, 32
          %s1057 = scalar_lea.vmem [#allocation2], %s1056
          %1058 = dma.done %s1054, 512
        $region44: #{tpu_custom_call.1} parent=39 // pred_fallthru
          _
        // Predicated region
        $region45: #{tpu_custom_call.1} parent=39 // pred_check
          %p1059 = pneg %p139
        $region46: #{tpu_custom_call.1} parent=39 // pred_check_branch
          %1061 = sbr.rel (%p1059) target = $region48
        $region47: #{tpu_custom_call.1} parent=39 // pred_region
          %s1062 = sand.u32 %s124, 1
          %s1063 = scalar_lea.sflag [#allocation5], %s1062
          %s1064 = sand.u32 %s124, 1
          %s1065 = smul.addr %s1064, 32
          %s1066 = scalar_lea.vmem [#allocation4], %s1065
          %1067 = dma.done %s1063, 512
        $region48: #{tpu_custom_call.1} parent=39 // pred_fallthru
          _
      $region40: #{tpu_custom_call.1} parent=5 // pred_fallthru
        _
    $region6: #{tpu_custom_call.1} parent=1 // loop_footer
      %s20 = sadd.s32 1, %s16
    $region7: #{tpu_custom_call.1} parent=1 // loop_footer_branch
      %15 = sbr.rel target = $region3
    $region8: #{tpu_custom_call.1} parent=1 // loop_exit
      _
    %1068 = vsyncpa [#allocation3], 1
    %s1069 = scalar_lea.sflag [#allocation3], 1
    %1070 = vsyncpa %s1069, 1
    %1071 = vsyncpa [#allocation5], 1
    %s1072 = scalar_lea.sflag [#allocation5], 1
    %1073 = vsyncpa %s1072, 1

</llo_original>
